<compile_context>
chip_gen: v6e
topology: v6e:2x2x1
jax: 0.10.0
libtpu: 0.0.40
codegen_flags: <defaults>
</compile_context>

<pallas_src>
import functools

import jax
import jax.numpy as jnp
from jax import lax
from jax.experimental import pallas as pl
from jax.experimental.pallas import tpu as pltpu


def _round_up(v, m):
    return ((v + m - 1) // m) * m


def _round_down(v, m):
    return (v // m) * m


def _vmem_capacity_bytes():
    """Per-core VMEM capacity; conservative fallback (v7x = 64 MiB) if unknown."""
    try:
        cap = getattr(pltpu.get_tpu_info(), "vmem_capacity_bytes", None)
        if cap:
            return int(cap)
    except Exception:
        pass
    return 64 << 20


def _pick_tiling(nk, cin, cout, batch, x_bytes, w_bytes, out_bytes):
    """Lane-tile TM sized from a VMEM budget that accounts for Cin AND Cout."""
    cap = _vmem_capacity_bytes()
    budget = (cap * 5) // 8          # ~62% of VMEM for the pipelined buffers
    vmem_limit = (cap * 7) // 8      # scoped-VMEM limit handed to Mosaic
    # Grid-invariant operands (weight, bias): the DMA is skipped after step 0
    # but the pipeline still allocates two buffers, so charge them up front.
    # (pipeline_mode=pl.Buffered(1) could reclaim half of this.)
    fixed = 2 * cout * cin * w_bytes + 2 * cout * 4 + (256 << 10)
    # Per-lane cost of the apply pass (the wider of the two passes):
    #   2x double-buffered x tile + 2x double-buffered out tile
    #   + ~1x f32 (Cout, TM) intermediate before the output cast/store.
    per_lane = 2 * cin * x_bytes + 2 * cout * out_bytes + cout * 4
    avail = max(budget - fixed, per_lane * 128)
    tm = max(128, _round_down(avail // per_lane, 128))
    tm = min(tm, _round_up(nk, 128))
    # Keep at least ~8 grid steps so the double-buffer has work to overlap;
    # per-step overhead (~0.35us) is negligible above ~512-lane tiles.
    min_steps = 8
    if batch * pl.cdiv(nk, tm) < min_steps:
        tm_small = _round_up(pl.cdiv(nk, pl.cdiv(min_steps, batch)), 128)
        tm = max(128, min(tm, tm_small))
    return tm, int(vmem_limit)


def _stats_kernel(x_ref, sum_ref, gram_ref, *, nk, compute_dtype, mask_tail):
    """Per-batch partial sum(x) (Cin,1) and Gram x@x^T (Cin,Cin) over positions."""
    m = pl.program_id(1)

    @pl.when(m == 0)
    def _():
        sum_ref[...] = jnp.zeros_like(sum_ref)
        gram_ref[...] = jnp.zeros_like(gram_ref)

    x = x_ref[0].astype(compute_dtype)                      # (Cin, TM)
    if mask_tail:
        # Ragged last tile: lanes beyond nk contain garbage from the partial
        # DMA; select them to zero (exact for sum and Gram).
        tm = x.shape[1]
        lane = lax.broadcasted_iota(jnp.int32, x.shape, 1)
        valid = nk - m * tm                                  # >= TM except last tile
        x = jnp.where(lane < valid, x, jnp.zeros_like(x))
    # Per-channel sum over positions (small XLU reduce: Cin rows, f32 accum).
    sum_ref[0] += jnp.sum(x.astype(jnp.float32), axis=1, keepdims=True)
    # Gram matrix on the MXU: contract the TM axis of x with itself.
    gram_ref[0] += lax.dot_general(
        x, x, dimension_numbers=(((1,), (1,)), ((), ())),
        preferred_element_type=jnp.float32)


def _apply_kernel(x_ref, w_ref, b_ref, o_ref, *, activation, compute_dtype):
    """y = act(W' @ x + b'); any BN has been folded into W'/b' by the caller."""
    x = x_ref[0].astype(compute_dtype)                       # (Cin, TM)
    y = jnp.dot(w_ref[...], x, preferred_element_type=jnp.float32)
    y = y + b_ref[...]                                       # (Cout,1) over lanes
    if activation == "relu":
        y = jnp.maximum(y, 0.0)
    o_ref[0] = y.astype(o_ref.dtype)


class SharedMLP:
    """JAX/Pallas re-implementation of the PyTorch SharedMLP (kernel_size=1)."""

    def __init__(self, in_channels, out_channels, kernel_size=1, stride=1,
                 transpose=False, bn=False, activation_fn=None,
                 compute_dtype=jnp.bfloat16, key=None):
        if kernel_size != 1 or stride != 1 or transpose:
            # TODO(synk): general kernel_size/stride/ConvTranspose2d not implemented;
            # the module is always used as a 1x1 shared MLP.
            raise NotImplementedError("only pointwise (1x1, stride 1) conv supported")
        self.cin = in_channels
        self.cout = out_channels
        self.use_bn = bool(bn)
        self.activation = activation_fn      # None or "relu"
        self.eps = 1e-6                      # matches nn.BatchNorm2d(eps=1e-06)
        self.compute_dtype = jnp.dtype(compute_dtype)

        key = jax.random.PRNGKey(42) if key is None else key
        kw, kb = jax.random.split(key)
        # PyTorch Conv2d default init: U(-1/sqrt(fan_in)), fan_in = Cin (1x1 kernel).
        bound = 1.0 / (in_channels ** 0.5)
        # Weight stored channels-first for the kernel: (Cout, Cin), f32 master copy.
        self.weight = jax.random.uniform(kw, (out_channels, in_channels),
                                         jnp.float32, -bound, bound)
        # Per-channel vectors stored as (Cout, 1) so they broadcast over lanes.
        self.bias = jax.random.uniform(kb, (out_channels, 1),
                                       jnp.float32, -bound, bound)
        self.gamma = jnp.ones((out_channels, 1), jnp.float32)
        self.beta = jnp.zeros((out_channels, 1), jnp.float32)
        # TODO(synk): BatchNorm running-stats update (eval-mode inference) not
        # implemented; this matches the training-mode forward only.

    def __call__(self, x):
        # x: (B, Cin, N, K) NCHW, like the PyTorch module.
        B, Cin, N, K = x.shape
        assert Cin == self.cin
        Cout = self.cout
        nk = N * K
        cdt = self.compute_dtype
        out_dtype = x.dtype

        # NCHW -> (B, Cin, N*K): a free reshape.  No transpose, NO padding:
        # ragged tails are handled inside the grid (masked reads in the stats
        # pass, clipped out-of-bounds writes in the apply pass).
        x3 = x.reshape(B, Cin, nk)

        tm, vmem_limit = _pick_tiling(
            nk, Cin, Cout, B,
            x_bytes=x3.dtype.itemsize,
            w_bytes=cdt.itemsize,
            out_bytes=jnp.dtype(out_dtype).itemsize)
        nm = pl.cdiv(nk, tm)
        grid = (B, nm)

        x_spec = pl.BlockSpec((1, Cin, tm), lambda b, m: (b, 0, m))
        w_spec = pl.BlockSpec((Cout, Cin), lambda b, m: (0, 0))
        vec_spec = pl.BlockSpec((Cout, 1), lambda b, m: (0, 0))
        o_spec = pl.BlockSpec((1, Cout, tm), lambda b, m: (b, 0, m))

        w_eff, b_eff = self.weight, self.bias
        if self.use_bn:
            # Pass 1: per-batch partial sum(x) and Gram(x).  The conv bias
            # cancels inside BN and is skipped entirely.  Batch axis is
            # "parallel" (megacore on v7x); the tiny (B,Cin,*) partials are
            # reduced over B in XLA.
            stats_kernel = functools.partial(
                _stats_kernel, nk=nk, compute_dtype=cdt,
                mask_tail=(nk % tm != 0))
            sum_p, gram_p = pl.pallas_call(
                stats_kernel,
                out_shape=(jax.ShapeDtypeStruct((B, Cin, 1), jnp.float32),
                           jax.ShapeDtypeStruct((B, Cin, Cin), jnp.float32)),
                grid=grid,
                in_specs=[x_spec],
                out_specs=(pl.BlockSpec((1, Cin, 1), lambda b, m: (b, 0, 0)),
                           pl.BlockSpec((1, Cin, Cin), lambda b, m: (b, 0, 0))),
                compiler_params=pltpu.CompilerParams(
                    dimension_semantics=("parallel", "arbitrary"),
                    vmem_limit_bytes=vmem_limit),
            )(x3)

            m_true = float(B * nk)
            mean_x = jnp.sum(sum_p, axis=0) / m_true                  # (Cin, 1)
            gram = jnp.sum(gram_p, axis=0)                            # (Cin, Cin)
            # Center in x-space (covariance of x) before projecting through W:
            # var_y = diag(W Cov_x W^T), mean_y = W mean_x (bias cancels in BN).
            cov_x = gram / m_true - mean_x @ mean_x.T                 # (Cin, Cin)
            mean_y = self.weight @ mean_x                             # (Cout, 1)
            var_y = jnp.maximum(
                jnp.sum((self.weight @ cov_x) * self.weight,
                        axis=1, keepdims=True), 0.0)                  # (Cout, 1)
            scale = self.gamma * lax.rsqrt(var_y + self.eps)          # (Cout, 1)
            # Fold BN into the conv: out = (scale*W) @ x + (beta - scale*mean_y).
            w_eff = self.weight * scale
            b_eff = self.beta - scale * mean_y
            # TODO(synk): for squeeze layers (Cout << Cin) caching y from pass 1
            # and rescaling it in pass 2 (input_output_aliases) would read less
            # HBM than re-reading x; not needed for the usual ascending MLP.

        # Pass 2: plain conv + bias + activation, both grid axes "parallel".
        apply_kernel = functools.partial(
            _apply_kernel, activation=self.activation, compute_dtype=cdt)
        out3 = pl.pallas_call(
            apply_kernel,
            out_shape=jax.ShapeDtypeStruct((B, Cout, nk), out_dtype),
            grid=grid,
            in_specs=[x_spec, w_spec, vec_spec],
            out_specs=o_spec,
            compiler_params=pltpu.CompilerParams(
                dimension_semantics=("parallel", "parallel"),
                vmem_limit_bytes=vmem_limit),
        )(x3, w_eff.astype(cdt), b_eff.astype(jnp.float32))

        # (B, Cout, N*K) -> NCHW (B, Cout, N, K): free reshape, no slicing.
        return out3.reshape(B, Cout, N, K)


def _reference(x, mlp):
    """Plain-JAX f32 reference mirroring the PyTorch forward."""
    B, Cin, N, K = x.shape
    x2d = jnp.transpose(x, (0, 2, 3, 1)).reshape(-1, Cin).astype(jnp.float32)
    y = x2d @ mlp.weight.T + mlp.bias[:, 0]                           # (M, Cout)
    if mlp.use_bn:
        m = jnp.mean(y, axis=0, keepdims=True)
        v = jnp.mean((y - m) ** 2, axis=0, keepdims=True)
        y = (y - m) * lax.rsqrt(v + mlp.eps) * mlp.gamma[:, 0] + mlp.beta[:, 0]
    if mlp.activation == "relu":
        y = jnp.maximum(y, 0.0)
    return jnp.transpose(y.reshape(B, N, K, mlp.cout), (0, 3, 1, 2))


if __name__ == "__main__":
    B, Cin, Cout, N, K = 2, 4, 8, 16, 16
    key = jax.random.PRNGKey(0)
    kx, kp1, kp2 = jax.random.split(key, 3)
    x = jax.random.normal(kx, (B, Cin, N, K), jnp.float32)

    # Case 1: plain conv (no BN, no activation), f32 compute path.
    mlp_plain = SharedMLP(Cin, Cout, bn=False, activation_fn=None,
                          compute_dtype=jnp.float32, key=kp2)
    out = jax.block_until_ready(mlp_plain(x))
    assert out.shape == (B, Cout, N, K)
    ref = _reference(x, mlp_plain)
    assert jnp.allclose(out, ref, atol=2e-4, rtol=2e-4), "mismatch (plain conv, f32)"

    # Case 2: conv + BN + ReLU, f32 compute path (tight tolerance).
    mlp_bn32 = SharedMLP(Cin, Cout, bn=True, activation_fn="relu",
                         compute_dtype=jnp.float32, key=kp1)
    out = jax.block_until_ready(mlp_bn32(x))
    ref = _reference(x, mlp_bn32)
    assert jnp.allclose(out, ref, atol=2e-4, rtol=2e-4), "mismatch (bn+relu, f32)"

    # Case 3: conv + BN + ReLU with the default bf16 MXU compute path.
    mlp_bn16 = SharedMLP(Cin, Cout, bn=True, activation_fn="relu", key=kp1)
    out = jax.block_until_ready(mlp_bn16(x))
    ref = _reference(x, mlp_bn16)
    assert jnp.allclose(out, ref, atol=5e-2, rtol=5e-2), "mismatch (bn+relu, bf16)"

    # Case 4: ragged N*K (not a multiple of the 128-lane tile): exercises the
    # masked stats tail and the clipped out-of-bounds output writes (no pad).
    K2 = 9
    x_rag = jax.random.normal(kx, (B, Cin, N, K2), jnp.float32)
    out = jax.block_until_ready(mlp_bn16(x_rag))
    ref = _reference(x_rag, mlp_bn16)
    assert out.shape == (B, Cout, N, K2)
    assert jnp.allclose(out, ref, atol=5e-2, rtol=5e-2), "mismatch (ragged, bf16)"

    print("KERNEL_OK")
</pallas_src>

<mosaic_0001>
module attributes {stable_mosaic.version = 11 : i64} {
  func.func @_apply_kernel(%arg0: i32, %arg1: i32, %arg2: memref<1x4x128xf32, #tpu.memory_space<vmem>>, %arg3: memref<8x4xf32, #tpu.memory_space<vmem>>, %arg4: memref<8x1xf32, #tpu.memory_space<vmem>>, %arg5: memref<1x8x128xf32, #tpu.memory_space<vmem>>) attributes {dimension_semantics = [#tpu.dimension_semantics<parallel>, #tpu.dimension_semantics<parallel>], iteration_bounds = array<i64: 2, 2>, scalar_prefetch = 0 : i64, scratch_operands = 0 : i64, tpu.core_type = #tpu.core_type<tc>, window_params = [{transform_indices = @transform_0, window_bounds = array<i64: 1, 4, 128>}, {pipeline_mode = #tpu.pipeline_mode<synchronous>, transform_indices = @transform_1, window_bounds = array<i64: 8, 4>}, {pipeline_mode = #tpu.pipeline_mode<synchronous>, transform_indices = @transform_2, window_bounds = array<i64: 8, 1>}, {transform_indices = @transform_3, window_bounds = array<i64: 1, 8, 128>}]} {
    %c0 = arith.constant 0 : index
    %c0_0 = arith.constant 0 : index
    %c0_1 = arith.constant 0 : index
    %0 = vector.load %arg2[%c0, %c0_0, %c0_1] : memref<1x4x128xf32, #tpu.memory_space<vmem>>, vector<1x4x128xf32>
    %1 = vector.shape_cast %0 : vector<1x4x128xf32> to vector<4x128xf32>
    %c0_2 = arith.constant 0 : index
    %c0_3 = arith.constant 0 : index
    %2 = vector.load %arg3[%c0_2, %c0_3] : memref<8x4xf32, #tpu.memory_space<vmem>>, vector<8x4xf32>
    %cst = arith.constant dense<0.000000e+00> : vector<8x128xf32>
    %3 = tpu.matmul %2, %1, %cst {dimension_numbers = #tpu.dot_dimension_numbers<[1], [0], [0], [1], [0, 0, 1, 1], [], []>} : vector<8x4xf32>, vector<4x128xf32>, vector<8x128xf32> -> vector<8x128xf32>
    %c0_4 = arith.constant 0 : index
    %c0_5 = arith.constant 0 : index
    %4 = vector.load %arg4[%c0_4, %c0_5] : memref<8x1xf32, #tpu.memory_space<vmem>>, vector<8x1xf32>
    %5 = vector.broadcast %4 : vector<8x1xf32> to vector<8x128xf32>
    %6 = arith.addf %3, %5 : vector<8x128xf32>
    %c0_6 = arith.constant 0 : index
    %c0_7 = arith.constant 0 : index
    %c0_8 = arith.constant 0 : index
    %7 = vector.load %arg5[%c0_6, %c0_7, %c0_8] : memref<1x8x128xf32, #tpu.memory_space<vmem>>, vector<1x8x128xf32>
    %8 = vector.shape_cast %7 : vector<1x8x128xf32> to vector<8x128xf32>
    %9 = vector.shape_cast %6 : vector<8x128xf32> to vector<1x8x128xf32>
    tpu.vector_store %arg5[%c0_6, %c0_7, %c0_8], %9 {strides = array<i32>} : memref<1x8x128xf32, #tpu.memory_space<vmem>>, vector<1x8x128xf32>,
    return
  }
  func.func @transform_0(%arg0: i32, %arg1: i32) -> (i32, i32, i32) {
    %c0_i32 = arith.constant 0 : i32
    %c0_i32_0 = arith.constant 0 : i32
    return %arg0, %c0_i32, %arg1 : i32, i32, i32
  }
  func.func @transform_1(%arg0: i32, %arg1: i32) -> (i32, i32) {
    %c0_i32 = arith.constant 0 : i32
    %c0_i32_0 = arith.constant 0 : i32
    %c0_i32_1 = arith.constant 0 : i32
    return %c0_i32, %c0_i32_0 : i32, i32
  }
  func.func @transform_2(%arg0: i32, %arg1: i32) -> (i32, i32) {
    %c0_i32 = arith.constant 0 : i32
    %c0_i32_0 = arith.constant 0 : i32
    %c0_i32_1 = arith.constant 0 : i32
    return %c0_i32, %c0_i32_0 : i32, i32
  }
  func.func @transform_3(%arg0: i32, %arg1: i32) -> (i32, i32, i32) {
    %c0_i32 = arith.constant 0 : i32
    %c0_i32_0 = arith.constant 0 : i32
    return %arg0, %c0_i32, %arg1 : i32, i32, i32
  }
}

</mosaic_0001>

<llo_original>
// kernel: tpu_custom_call.1
$region0: #{tpu_custom_call.1}
  #allocation0 [shape = 'u32[]', space=smem, size = 0x4, offset = 0x4, fixed_abs, tag = 'smem constant byte address 0x4 - core index']
  #allocation1 [shape = 'u32[144,128]{1,0:T(1,128)}', space=vmem, size = 0x12000, scoped, tag = 'internal scratch']
  %s0 = inlined_call_operand.vmem [shape: f32[2,4,256], index: 0, kind: input, shape index: {}]
  %s1 = inlined_call_operand.vmem [shape: f32[8,4], index: 1, kind: input, shape index: {}]
  %s2 = inlined_call_operand.vmem [shape: f32[8,1], index: 2, kind: input, shape index: {}]
  %s3 = inlined_call_operand.hbm [shape: f32[2,8,256], index: 3, kind: output, shape index: {}]
  %s4 = sld [smem:[#allocation0]]
  $region45: #{tpu_custom_call.1} parent=0
    _
  %s6 = ssub.s32 1, %s4
  %s7 = scalar_select 0, %s6, %s4
  $region1: #{tpu_custom_call.1} parent=0
    #allocation2 [shape = 'u8[8192]{0}', space=vmem, size = 0x2000, scoped, tag = 'output window, operand 0']
    #allocation3 [shape = 's32[2]{0}', space=sflag, size = 0x8, scoped, tag = 'scoped memory for tpu_custom_call.1']
    %8 = vsyncpa [#allocation3], 0
    %s9 = scalar_lea.sflag [#allocation3], 1
    %10 = vsyncpa %s9, 0
    loop: start=0, step=1, limit=6
    $region2: #{tpu_custom_call.1} parent=1 // loop_pre_header
      _
    $region3: #{tpu_custom_call.1} parent=1 // loop_header
      %s12 = sphi 0, %s16
      %p13 = scmp.ge.s32.totalorder %s12, 6
      %s19 = sphi 0, %s31
      %s20 = sphi 0, %s27
      %s21 = sphi 0, %s19
      %s22 = sphi 0, %s20
      %s23 = sphi 0, %s21
      %s24 = sphi 0, %s22
      %s36 = sphi 0, %s38
      %s39 = sphi 0, %s36
      %s40 = sphi 0, %s39
      %s56 = sphi 0, %s40
      %s60 = sphi 0, %s60
      %s62 = sphi 0, %s60
      %s63 = sphi 0, %s62
      %s77 = sphi 0, %s63
      %s81 = sphi 0, %s81
      %s83 = sphi 0, %s81
      %s84 = sphi 0, %s83
      %s98 = sphi 0, %s84
      %s106 = sphi 0, %s108
      %s109 = sphi 0, %s106
      %s110 = sphi 0, %s109
      %s126 = sphi 0, %s110
    $region4: #{tpu_custom_call.1} parent=1 // loop_header_branch
      %15 = sbr.rel (%p13) target = $region8
    $region5: #{tpu_custom_call.1} parent=1 // loop_body
      %s17 = ssub.s32 %s12, 1
      %s18 = ssub.s32 %s12, 2
      %s25 = sadd.s32 1, %s20
      %p26 = scmp.ge.s32.totalorder %s25, 2
      %s27 = scalar_select %p26, 0, %s25
      %s28 = sadd.s32 1, %s19
      %s29 = scalar_select %p26, %s28, %s19
      %p30 = scmp.ge.s32.totalorder %s29, 2
      %s31 = scalar_select %p30, 0, %s29
      %s32 = ssub.s32 %s19, %s31
      %s33 = ssub.s32 %s20, %s27
      %s34 = sor.u32 %s32, %s33
      %p35 = scmp.eq.s32.totalorder %s34, 0
      %s37 = sadd.s32 %s36, 1
      %s38 = scalar_select %p35, %s36, %s37
      %p41 = pneg %p35
      %p42 = scmp.eq.s32.totalorder %s12, 3
      %p43 = por %p41, %p42
      %p44 = scmp.ne.s32.totalorder %s36, %s39
      %p45 = scmp.eq.s32.totalorder %s12, 0
      %p46 = por %p44, %p45
      %p47 = scmp.ne.s32.totalorder %s36, %s39
      %p48 = scmp.eq.s32.totalorder %s17, 3
      %p49 = por %p47, %p48
      %p50 = scmp.ne.s32.totalorder %s39, %s40
      %p51 = scmp.eq.s32.totalorder %s17, 0
      %p52 = por %p50, %p51
      %p53 = scmp.ne.s32.totalorder %s39, %s40
      %p54 = scmp.eq.s32.totalorder %s18, 3
      %p55 = por %p53, %p54
      %p57 = scmp.ne.s32.totalorder %s40, %s56
      %p58 = scmp.eq.s32.totalorder %s18, 0
      %p59 = por %p57, %p58
      %s61 = sadd.s32 %s60, 1
      %p64 = scmp.eq.s32.totalorder %s12, 3
      %p65 = scmp.ne.s32.totalorder %s60, %s62
      %p66 = scmp.eq.s32.totalorder %s12, 0
      %p67 = por %p65, %p66
      %p68 = scmp.ne.s32.totalorder %s60, %s62
      %p69 = scmp.eq.s32.totalorder %s17, 3
      %p70 = por %p68, %p69
      %p71 = scmp.ne.s32.totalorder %s62, %s63
      %p72 = scmp.eq.s32.totalorder %s17, 0
      %p73 = por %p71, %p72
      %p74 = scmp.ne.s32.totalorder %s62, %s63
      %p75 = scmp.eq.s32.totalorder %s18, 3
      %p76 = por %p74, %p75
      %p78 = scmp.ne.s32.totalorder %s63, %s77
      %p79 = scmp.eq.s32.totalorder %s18, 0
      %p80 = por %p78, %p79
      %s82 = sadd.s32 %s81, 1
      %p85 = scmp.eq.s32.totalorder %s12, 3
      %p86 = scmp.ne.s32.totalorder %s81, %s83
      %p87 = scmp.eq.s32.totalorder %s12, 0
      %p88 = por %p86, %p87
      %p89 = scmp.ne.s32.totalorder %s81, %s83
      %p90 = scmp.eq.s32.totalorder %s17, 3
      %p91 = por %p89, %p90
      %p92 = scmp.ne.s32.totalorder %s83, %s84
      %p93 = scmp.eq.s32.totalorder %s17, 0
      %p94 = por %p92, %p93
      %p95 = scmp.ne.s32.totalorder %s83, %s84
      %p96 = scmp.eq.s32.totalorder %s18, 3
      %p97 = por %p95, %p96
      %p99 = scmp.ne.s32.totalorder %s84, %s98
      %p100 = scmp.eq.s32.totalorder %s18, 0
      %p101 = por %p99, %p100
      %s102 = ssub.s32 %s19, %s31
      %s103 = ssub.s32 %s20, %s27
      %s104 = sor.u32 %s102, %s103
      %p105 = scmp.eq.s32.totalorder %s104, 0
      %s107 = sadd.s32 %s106, 1
      %s108 = scalar_select %p105, %s106, %s107
      %p111 = pneg %p105
      %p112 = scmp.eq.s32.totalorder %s12, 3
      %p113 = por %p111, %p112
      %p114 = scmp.ne.s32.totalorder %s106, %s109
      %p115 = scmp.eq.s32.totalorder %s12, 0
      %p116 = por %p114, %p115
      %p117 = scmp.ne.s32.totalorder %s106, %s109
      %p118 = scmp.eq.s32.totalorder %s17, 3
      %p119 = por %p117, %p118
      %p120 = scmp.ne.s32.totalorder %s109, %s110
      %p121 = scmp.eq.s32.totalorder %s17, 0
      %p122 = por %p120, %p121
      %p123 = scmp.ne.s32.totalorder %s109, %s110
      %p124 = scmp.eq.s32.totalorder %s18, 3
      %p125 = por %p123, %p124
      %p127 = scmp.ne.s32.totalorder %s110, %s126
      %p128 = scmp.eq.s32.totalorder %s18, 0
      %p129 = por %p127, %p128
      %p130 = scmp.le.s32.totalorder 1, %s12
      %p131 = scmp.lt.s32.totalorder %s12, 5
      %p132 = pnand %p130, %p131
      %p133 = pneg %p132
      // Predicated region
      $region9: #{tpu_custom_call.1} parent=5 // pred_check
        _
      $region10: #{tpu_custom_call.1} parent=5 // pred_check_branch
        %135 = sbr.rel (%p132) target = $region12
      $region11: #{tpu_custom_call.1} parent=5 // pred_region
        %s136 = ssub.s32 %s12, 1
        // Predicated region
        $region13: #{tpu_custom_call.1} parent=11 // pred_check
          %p137 = pneg %p73
        $region14: #{tpu_custom_call.1} parent=11 // pred_check_branch
          %139 = sbr.rel (%p137) target = $region16
        $region15: #{tpu_custom_call.1} parent=11 // pred_region
          _
        $region16: #{tpu_custom_call.1} parent=11 // pred_fallthru
          _
        // Predicated region
        $region17: #{tpu_custom_call.1} parent=11 // pred_check
          %p140 = pneg %p94
        $region18: #{tpu_custom_call.1} parent=11 // pred_check_branch
          %142 = sbr.rel (%p140) target = $region20
        $region19: #{tpu_custom_call.1} parent=11 // pred_region
          _
        $region20: #{tpu_custom_call.1} parent=11 // pred_fallthru
          _
      $region12: #{tpu_custom_call.1} parent=5 // pred_fallthru
        _
      %p143 = scmp.lt.s32.totalorder %s12, 4
      // Predicated region
      $region21: #{tpu_custom_call.1} parent=5 // pred_check
        %p144 = pneg %p143
      $region22: #{tpu_custom_call.1} parent=5 // pred_check_branch
        %146 = sbr.rel (%p144) target = $region24
      $region23: #{tpu_custom_call.1} parent=5 // pred_region
        // Predicated region
        $region25: #{tpu_custom_call.1} parent=23 // pred_check
          %p147 = pneg %p46
        $region26: #{tpu_custom_call.1} parent=23 // pred_check_branch
          %149 = sbr.rel (%p147) target = $region28
        $region27: #{tpu_custom_call.1} parent=23 // pred_region
          %p150 = scmp.lt.s32.totalorder %s19, 1
          %s151 = scalar_select %p150, %s19, 1
          %p152 = scmp.lt.s32.totalorder %s20, 1
          %s153 = scalar_select %p152, %s20, 1
          %s154 = smul.addr %s151, 2
          %s155 = sadd.s32 %s153, %s154
          %s156 = smul.addr %s155, 4
          %s157 = scalar_lea.vmem %s0, %s156
        $region28: #{tpu_custom_call.1} parent=23 // pred_fallthru
          _
      $region24: #{tpu_custom_call.1} parent=5 // pred_fallthru
        _
      %p158 = scmp.le.s32.totalorder 1, %s12
      %p159 = scmp.lt.s32.totalorder %s12, 5
      %p160 = pnand %p158, %p159
      %p161 = pneg %p160
      // Predicated region
      $region29: #{tpu_custom_call.1} parent=5 // pred_check
        _
      $region30: #{tpu_custom_call.1} parent=5 // pred_check_branch
        %163 = sbr.rel (%p160) target = $region32
      $region31: #{tpu_custom_call.1} parent=5 // pred_region
        %s164 = ssub.s32 %s12, 1
        %p165 = scmp.lt.s32.totalorder %s21, 1
        %s166 = scalar_select %p165, %s21, 1
        %p167 = scmp.lt.s32.totalorder %s22, 1
        %s168 = scalar_select %p167, %s22, 1
        %s169 = smul.addr %s166, 2
        %s170 = sadd.s32 %s168, %s169
        %s171 = smul.addr %s170, 4
        %s172 = scalar_lea.vmem %s0, %s171
        %p173 = pneg %p52
        %p174 = pneg %p49
        %p175 = pneg %p73
        %p176 = pneg %p70
        %p177 = pneg %p94
        %p178 = pneg %p91
        %p179 = pneg %p122
        %p180 = pneg %p119
        %s181 = sand.u32 %s109, 1
        %s182 = scalar_lea.sflag [#allocation3], %s181
        %s183 = sand.u32 %s109, 1
        %s184 = smul.addr %s183, 8
        %s185 = scalar_lea.vmem [#allocation2], %s184
        %p186 = scmp.lt.s32.totalorder %s21, 1
        %s187 = scalar_select %p186, %s21, 1
        %p188 = scmp.lt.s32.totalorder %s22, 1
        %s189 = scalar_select %p188, %s22, 1
        %s190 = smul.addr %s187, 2
        %s191 = sadd.s32 %s189, %s190
        %s192 = smul.addr %s191, 4
        %s193 = scalar_lea.vmem %s0, %s192
        %v194 = vld [vmem:[%s193] sm:$0xf]
        %v195 = vld [vmem:[%s1] sm:$0xff]
        %v196 = vld [vmem:[%s2] sm:$0xff]
        %198 = vset.pattern.permute.xlu0 0
        %199 = vperm.xlu0 %198, %v196
        %v200 = vpop.permute.xlu0 %199
        %vm202 = vcmask 31744
        %v204 = vsel %vm202, %v195, 0
        %vm206 = vcmask 1043456
        %v208 = vsel %vm206, %v194, 0
        %210 = vmatprep.subr.mxu0 0.0
        %211 = vmatpush1.msra.mxu0 0.0
        %212 = vmatprep.subr.mxu0 0.0
        %213 = vmatpush1.msra.mxu0 0.0
        %214 = vmatprep.subr.mxu0 0.0
        %215 = vmatpush1.msra.mxu0 0.0
        %216 = vmatprep.subr.mxu0 0.0
        %217 = vmatpush1.msra.mxu0 0.0
        %218 = vmatprep.subr.mxu0 0.0
        %219 = vmatpush1.msra.mxu0 0.0
        %220 = vmatprep.subr.mxu0 0.0
        %221 = vmatpush1.msra.mxu0 0.0
        %222 = vmatprep.subr.mxu0 0.0
        %223 = vmatpush1.msra.mxu0 0.0
        %224 = vmatprep.subr.mxu0 0.0
        %225 = vmatpush1.msra.mxu0 0.0
        %226 = vmatprep.subr.mxu0 0.0
        %227 = vmatpush1.msra.mxu0 0.0
        %228 = vmatprep.subr.mxu0 0.0
        %229 = vmatpush1.msra.mxu0 0.0
        %230 = vmatprep.subr.mxu0 0.0
        %231 = vmatpush1.msra.mxu0 0.0
        %232 = vmatprep.subr.mxu0 0.0
        %233 = vmatpush1.msra.mxu0 0.0
        %234 = vmatprep.subr.mxu0 0.0
        %235 = vmatpush1.msra.mxu0 0.0
        %236 = vmatprep.subr.mxu0 0.0
        %237 = vmatpush1.msra.mxu0 0.0
        %238 = vmatprep.subr.mxu0 0.0
        %239 = vmatpush1.msra.mxu0 0.0
        %240 = vmatprep.subr.mxu0 0.0
        %241 = vmatpush1.msra.mxu0 %v208
        %242 = vmatprep.subr.mxu0 0.0
        %243 = vmatpush2.msra.mxu0 0.0
        %244 = vmatprep.subr.mxu0 0.0
        %245 = vmatpush2.msra.mxu0 0.0
        %246 = vmatprep.subr.mxu0 0.0
        %247 = vmatpush2.msra.mxu0 0.0
        %248 = vmatprep.subr.mxu0 0.0
        %249 = vmatpush2.msra.mxu0 0.0
        %250 = vmatprep.subr.mxu0 0.0
        %251 = vmatpush2.msra.mxu0 0.0
        %252 = vmatprep.subr.mxu0 0.0
        %253 = vmatpush2.msra.mxu0 0.0
        %254 = vmatprep.subr.mxu0 0.0
        %255 = vmatpush2.msra.mxu0 0.0
        %256 = vmatprep.subr.mxu0 0.0
        %257 = vmatpush2.msra.mxu0 0.0
        %258 = vmatprep.subr.mxu0 0.0
        %259 = vmatpush2.msra.mxu0 0.0
        %260 = vmatprep.subr.mxu0 0.0
        %261 = vmatpush2.msra.mxu0 0.0
        %262 = vmatprep.subr.mxu0 0.0
        %263 = vmatpush2.msra.mxu0 0.0
        %264 = vmatprep.subr.mxu0 0.0
        %265 = vmatpush2.msra.mxu0 0.0
        %266 = vmatprep.subr.mxu0 0.0
        %267 = vmatpush2.msra.mxu0 0.0
        %268 = vmatprep.subr.mxu0 0.0
        %269 = vmatpush2.msra.mxu0 0.0
        %270 = vmatprep.subr.mxu0 0.0
        %271 = vmatpush2.msra.mxu0 0.0
        %272 = vmatprep.subr.mxu0 0.0
        %273 = vmatpush2.msra.mxu0 0.0
        %274 = vmatprep.mubr.f32.mxu0 0.0
        %275 = vmatmul.mubr.f32.gmra.mxu0 %v204
        %v276 = vpop.f32.mrf.mxu0
        %v277 = vadd.f32 %v200, %v276
        %v278 = vpop.f32.mrf.mxu0
        %279 = vdwg.mxu0
        %280 = vst [vmem:[%s185] sm:$0xff] %v277
        %s281 = sand.u32 %s109, 1
        %s282 = scalar_lea.sflag [#allocation3], %s281
        %s283 = sand.u32 %s109, 1
        %s284 = smul.addr %s283, 8
        %s285 = scalar_lea.vmem [#allocation2], %s284
        // Predicated region
        $region33: #{tpu_custom_call.1} parent=31 // pred_check
          %p286 = pneg %p119
        $region34: #{tpu_custom_call.1} parent=31 // pred_check_branch
          %288 = sbr.rel (%p286) target = $region36
        $region35: #{tpu_custom_call.1} parent=31 // pred_region
          %s290 = ssub.s32 128, 128
          %291 = vsyncadd %s282, %s290
          %s292 = smul.addr %s21, 2
          %s293 = sadd.s32 %s22, %s292
          %s294 = smul.addr %s293, 128
          %s295 = scalar_lea.hbm %s3, %s294
          %s297 = sshll.u32 %s285, 4
          %s298 = int_to_ptr.vmem [resolvable:$true] %s297
          %300 = dma.vmem_to_hbm [thread:$0]  %s298, 128, %s295, %s282
        $region36: #{tpu_custom_call.1} parent=31 // pred_fallthru
          _
      $region32: #{tpu_custom_call.1} parent=5 // pred_fallthru
        _
      %p301 = scmp.le.s32.totalorder 2, %s12
      // Predicated region
      $region37: #{tpu_custom_call.1} parent=5 // pred_check
        %p302 = pneg %p301
      $region38: #{tpu_custom_call.1} parent=5 // pred_check_branch
        %304 = sbr.rel (%p302) target = $region40
      $region39: #{tpu_custom_call.1} parent=5 // pred_region
        %s305 = ssub.s32 %s12, 2
        // Predicated region
        $region41: #{tpu_custom_call.1} parent=39 // pred_check
          %p306 = pneg %p125
        $region42: #{tpu_custom_call.1} parent=39 // pred_check_branch
          %308 = sbr.rel (%p306) target = $region44
        $region43: #{tpu_custom_call.1} parent=39 // pred_region
          %s309 = sand.u32 %s110, 1
          %s310 = scalar_lea.sflag [#allocation3], %s309
          %s311 = sand.u32 %s110, 1
          %s312 = smul.addr %s311, 8
          %s313 = scalar_lea.vmem [#allocation2], %s312
          %314 = dma.done %s310, 128
        $region44: #{tpu_custom_call.1} parent=39 // pred_fallthru
          _
      $region40: #{tpu_custom_call.1} parent=5 // pred_fallthru
        _
    $region6: #{tpu_custom_call.1} parent=1 // loop_footer
      %s16 = sadd.s32 1, %s12
    $region7: #{tpu_custom_call.1} parent=1 // loop_footer_branch
      %11 = sbr.rel target = $region3
    $region8: #{tpu_custom_call.1} parent=1 // loop_exit
      _
    %315 = vsyncpa [#allocation3], 1
    %s316 = scalar_lea.sflag [#allocation3], 1
    %317 = vsyncpa %s316, 1

</llo_original>
